<compile_context>
chip_gen: v6e
topology: v6e:2x2x1
jax: 0.10.0
libtpu: 0.0.40
codegen_flags: <defaults>
</compile_context>

<pallas_src>
import jax
import jax.numpy as jnp
import numpy as np
from jax.experimental import pallas as pl
from jax.experimental.pallas import tpu as pltpu


def _round_up(x, m):
    return ((x + m - 1) // m) * m


# ----------------------------------------------------------------------------
# Single fused kernel: 3 lane-dense matmuls (projection -> mid -> heads)
# ----------------------------------------------------------------------------
def _fused_forward_kernel(xin_ref, wp_ref, bp_ref, wm_ref, bm_ref,
                          wh_ref, bh_ref, out_ref):
    # xin_ref: (TB, K1p) bf16        wp_ref: (K1p, Pp) bf16   bp_ref: (1, Pp) f32
    # wm_ref : (Pp, Fp)  bf16        bm_ref: (1, Fp)  f32
    # wh_ref : (Fp, Lp)  bf16        bh_ref: (1, Lp)  f32
    # out_ref: (TB, Lp)  f32
    x = jnp.dot(xin_ref[...], wp_ref[...], preferred_element_type=jnp.float32)
    x = jnp.maximum(x + bp_ref[...], 0.0)                       # f32 ReLU
    f = jnp.dot(x.astype(wm_ref.dtype), wm_ref[...],
                preferred_element_type=jnp.float32)
    f = jnp.maximum(f + bm_ref[...], 0.0)                       # f32 ReLU
    o = jnp.dot(f.astype(wh_ref.dtype), wh_ref[...],
                preferred_element_type=jnp.float32)
    out_ref[...] = (o + bh_ref[...]).astype(out_ref.dtype)


def fused_forward_pallas(packed, local_features, global_features, *,
                         batch_tile=None):
    dims = packed["dims"]
    B, R, Dl = local_features.shape
    Dg = global_features.shape[1]
    K1, K1p = dims["K1"], dims["K1p"]
    Pp, Fp = dims["Pp"], dims["Fp"]
    L, Lp = dims["L"], dims["Lp"]
    assert Dg + R * Dl == K1

    act_dtype = packed["Wp"].dtype

    # Lane-dense fused input (B, Dg + R*Dl), zero-padded to (Bpad, K1p).
    xin = jnp.concatenate(
        [global_features, local_features.reshape(B, R * Dl)],
        axis=1).astype(act_dtype)

    if batch_tile is None:
        batch_tile = min(256, _round_up(B, 8))     # >=8 sublanes per tile
    TB = _round_up(batch_tile, 8)
    Bpad = _round_up(B, TB)
    xin = jnp.pad(xin, ((0, Bpad - B), (0, K1p - K1)))

    grid = (Bpad // TB,)

    def tile_spec(cols):
        return pl.BlockSpec((TB, cols), lambda i: (i, 0))

    def resident(shape):                            # weights: constant block 0
        return pl.BlockSpec(shape, lambda i: (0,) * len(shape))

    weight_bytes = sum(
        int(np.prod(packed[k].shape)) * packed[k].dtype.itemsize
        for k in ("Wp", "bp", "Wm", "bm", "Wh", "bh"))
    act_bytes = TB * (2 * K1p * act_dtype.itemsize + 2 * Lp * 4 + (Pp + Fp) * 4)
    vmem_limit = int(min(64 * 2 ** 20,
                         max(16 * 2 ** 20, 2 * (weight_bytes + act_bytes))))

    out = pl.pallas_call(
        _fused_forward_kernel,
        out_shape=jax.ShapeDtypeStruct((Bpad, Lp), jnp.float32),
        grid=grid,
        in_specs=[
            tile_spec(K1p),                 # fused activations, batch-tiled
            resident((K1p, Pp)), resident((1, Pp)),   # projection W / b
            resident((Pp, Fp)), resident((1, Fp)),    # mid layer W / b
            resident((Fp, Lp)), resident((1, Lp)),    # fused heads W / b
        ],
        out_specs=tile_spec(Lp),
        compiler_params=pltpu.CompilerParams(
            dimension_semantics=("parallel",),        # megacore split on v7x
            vmem_limit_bytes=vmem_limit),
    )(xin, packed["Wp"], packed["bp"], packed["Wm"], packed["bm"],
      packed["Wh"], packed["bh"])

    return out[:B, :L]


# ----------------------------------------------------------------------------
# Parameter init (per-bbox math layout, mirrors the PyTorch module)
# ----------------------------------------------------------------------------
def init_params(key, local_feat_dim, global_feat_dim, hidden_dim, num_bboxes,
                num_regions, bbox_to_labels, bbox_group_to_labels):
    n_heads = len(bbox_to_labels) + len(bbox_group_to_labels)
    keys = jax.random.split(key, 6 + 2 * n_heads)
    s = 0.1
    H = hidden_dim
    S = num_regions + 1
    params = {
        "Wg": s * jax.random.normal(keys[0], (num_bboxes, global_feat_dim, H), jnp.float32),
        "bg": s * jax.random.normal(keys[1], (num_bboxes, H), jnp.float32),
        "Wl": s * jax.random.normal(keys[2], (num_bboxes, local_feat_dim, H), jnp.float32),
        "bl": s * jax.random.normal(keys[3], (num_bboxes, H), jnp.float32),
        "Wm": s * jax.random.normal(keys[4], (num_bboxes, S * H, H), jnp.float32),
        "bm": s * jax.random.normal(keys[5], (num_bboxes, H), jnp.float32),
    }
    kidx = 6
    loc_fc_w, loc_fc_b = [], []
    for _, labels in bbox_to_labels:
        n = len(labels)
        loc_fc_w.append(s * jax.random.normal(keys[kidx], (H, n), jnp.float32))
        loc_fc_b.append(s * jax.random.normal(keys[kidx + 1], (n,), jnp.float32))
        kidx += 2
    glob_fc_w, glob_fc_b = [], []
    for group, labels in bbox_group_to_labels:
        n = len(labels)
        glob_fc_w.append(s * jax.random.normal(
            keys[kidx], (H * len(group), n), jnp.float32))
        glob_fc_b.append(s * jax.random.normal(keys[kidx + 1], (n,), jnp.float32))
        kidx += 2
    params["loc_fc_w"] = loc_fc_w
    params["loc_fc_b"] = loc_fc_b
    params["glob_fc_w"] = glob_fc_w
    params["glob_fc_b"] = glob_fc_b
    return params


# ----------------------------------------------------------------------------
# One-time host-side packing into fused, padded, lane-dense layouts (exact).
# ----------------------------------------------------------------------------
def pack_params(params, num_regions, bbox_to_labels, bbox_group_to_labels,
                weight_dtype=jnp.bfloat16):
    Wg = np.asarray(params["Wg"]); bg = np.asarray(params["bg"])
    Wl = np.asarray(params["Wl"]); bl = np.asarray(params["bl"])
    Wm = np.asarray(params["Wm"]); bm = np.asarray(params["bm"])
    NB, Dg, H = Wg.shape
    Dl = Wl.shape[1]
    R = num_regions
    S = R + 1
    K1 = Dg + R * Dl
    P = NB * S * H
    F = NB * H
    L = sum(len(l) for _, l in bbox_to_labels) + \
        sum(len(l) for _, l in bbox_group_to_labels)

    K1p = _round_up(K1, 128)
    Pp = _round_up(P, 128)
    Fp = _round_up(F, 128)
    Lp = _round_up(L, 128)

    # Fused projection: per bbox i, slot 0 <- global proj, slots 1..R <- local.
    Wp = np.zeros((K1p, Pp), np.float32)
    bp = np.zeros((1, Pp), np.float32)
    for i in range(NB):
        base = i * S * H
        Wp[0:Dg, base:base + H] = Wg[i]
        bp[0, base:base + H] = bg[i]
        for r in range(R):
            rows = slice(Dg + r * Dl, Dg + (r + 1) * Dl)
            cols = slice(base + (r + 1) * H, base + (r + 2) * H)
            Wp[rows, cols] = Wl[i]
            bp[0, cols] = bl[i]

    # Fused mid layer: block-structured ((R+1)*H per bbox -> H per bbox).
    # NOTE: for large NB*H (v7x, 64 MiB VMEM) switch to NB per-bbox blocked
    # matmuls instead of this zero-padded block matrix.
    Wmf = np.zeros((Pp, Fp), np.float32)
    bmf = np.zeros((1, Fp), np.float32)
    for i in range(NB):
        Wmf[i * S * H:(i + 1) * S * H, i * H:(i + 1) * H] = Wm[i]
        bmf[0, i * H:(i + 1) * H] = bm[i]

    # Fused ragged heads (zero-padded; repeated bboxes in a group accumulate).
    Wh = np.zeros((Fp, Lp), np.float32)
    bh = np.zeros((1, Lp), np.float32)
    col = 0
    for i, (idx, labels) in enumerate(bbox_to_labels):
        n = len(labels)
        Wh[idx * H:(idx + 1) * H, col:col + n] = np.asarray(params["loc_fc_w"][i])
        bh[0, col:col + n] = np.asarray(params["loc_fc_b"][i])
        col += n
    for i, (group, labels) in enumerate(bbox_group_to_labels):
        n = len(labels)
        w = np.asarray(params["glob_fc_w"][i])
        for k, j in enumerate(group):
            Wh[j * H:(j + 1) * H, col:col + n] += w[k * H:(k + 1) * H, :]
        bh[0, col:col + n] = np.asarray(params["glob_fc_b"][i])
        col += n

    return {
        "Wp": jnp.asarray(Wp, weight_dtype), "bp": jnp.asarray(bp, jnp.float32),
        "Wm": jnp.asarray(Wmf, weight_dtype), "bm": jnp.asarray(bmf, jnp.float32),
        "Wh": jnp.asarray(Wh, weight_dtype), "bh": jnp.asarray(bh, jnp.float32),
        "dims": {"K1": K1, "K1p": K1p, "Pp": Pp, "Fp": Fp, "L": L, "Lp": Lp},
    }


# ----------------------------------------------------------------------------
# Pure-JAX f32 reference mirroring the PyTorch forward exactly
# ----------------------------------------------------------------------------
def forward_reference(params, local_features, global_features,
                      bbox_to_labels, bbox_group_to_labels):
    B = local_features.shape[0]
    NB = params["Wg"].shape[0]
    feats = []
    for i in range(NB):
        xg = global_features @ params["Wg"][i] + params["bg"][i]          # (B,H)
        xl = jnp.einsum("brd,dh->brh", local_features, params["Wl"][i]) \
             + params["bl"][i]                                            # (B,R,H)
        x = jnp.concatenate([xg[:, None, :], xl], axis=1).reshape(B, -1)
        x = jax.nn.relu(x)
        x = jax.nn.relu(x @ params["Wm"][i] + params["bm"][i])
        feats.append(x)
    scores = []
    for i, (idx, _labels) in enumerate(bbox_to_labels):
        scores.append(feats[idx] @ params["loc_fc_w"][i] + params["loc_fc_b"][i])
    for i, (group, _labels) in enumerate(bbox_group_to_labels):
        gf = jnp.concatenate([feats[j] for j in group], axis=1)
        scores.append(gf @ params["glob_fc_w"][i] + params["glob_fc_b"][i])
    return jnp.concatenate(scores, axis=1)


if __name__ == "__main__":
    # Small, self-consistent configuration.
    batch_size = 2
    num_regions = 4
    local_feat_dim = 32
    global_feat_dim = 48
    hidden_dim = 32
    num_bboxes = 3
    bbox_to_labels = [[0, [0, 1, 2]], [2, [3, 4]]]
    bbox_group_to_labels = [[[0, 1], [5, 6, 7, 8]], [[1, 2, 0], [9, 10]]]

    key = jax.random.PRNGKey(0)
    k_params, k_loc, k_glob = jax.random.split(key, 3)

    params = init_params(k_params, local_feat_dim, global_feat_dim, hidden_dim,
                         num_bboxes, num_regions, bbox_to_labels,
                         bbox_group_to_labels)
    packed = pack_params(params, num_regions, bbox_to_labels,
                         bbox_group_to_labels, weight_dtype=jnp.bfloat16)
    packed = jax.tree_util.tree_map(
        lambda x: jax.block_until_ready(x) if isinstance(x, jax.Array) else x,
        packed)

    local_features = jax.random.normal(
        k_loc, (batch_size, num_regions, local_feat_dim), jnp.float32)
    global_features = jax.random.normal(
        k_glob, (batch_size, global_feat_dim), jnp.float32)

    out = fused_forward_pallas(packed, local_features, global_features)
    out = jax.block_until_ready(out)

    ref = forward_reference(params, local_features, global_features,
                            bbox_to_labels, bbox_group_to_labels)
    ref = jax.block_until_ready(ref)

    total_labels = sum(len(lbls) for _, lbls in bbox_to_labels) + \
                   sum(len(lbls) for _, lbls in bbox_group_to_labels)
    assert out.shape == (batch_size, total_labels), out.shape
    # bf16 MXU operands with f32 accumulation -> loosened tolerance vs f32 ref.
    max_err = float(jnp.max(jnp.abs(out - ref)))
    assert max_err < 5e-2, max_err

    print("KERNEL_OK")
</pallas_src>

<mosaic_0001>
module attributes {stable_mosaic.version = 11 : i64} {
  func.func @_fused_forward_kernel(%arg0: i32, %arg1: memref<8x256xbf16, #tpu.memory_space<vmem>>, %arg2: memref<256x512xbf16, #tpu.memory_space<vmem>>, %arg3: memref<1x512xf32, #tpu.memory_space<vmem>>, %arg4: memref<512x128xbf16, #tpu.memory_space<vmem>>, %arg5: memref<1x128xf32, #tpu.memory_space<vmem>>, %arg6: memref<128x128xbf16, #tpu.memory_space<vmem>>, %arg7: memref<1x128xf32, #tpu.memory_space<vmem>>, %arg8: memref<8x128xf32, #tpu.memory_space<vmem>>) attributes {dimension_semantics = [#tpu.dimension_semantics<parallel>], iteration_bounds = array<i64: 1>, scalar_prefetch = 0 : i64, scratch_operands = 0 : i64, tpu.core_type = #tpu.core_type<tc>, window_params = [{transform_indices = @transform_0, window_bounds = array<i64: 8, 256>}, {pipeline_mode = #tpu.pipeline_mode<synchronous>, transform_indices = @transform_1, window_bounds = array<i64: 256, 512>}, {pipeline_mode = #tpu.pipeline_mode<synchronous>, transform_indices = @transform_2, window_bounds = array<i64: 1, 512>}, {pipeline_mode = #tpu.pipeline_mode<synchronous>, transform_indices = @transform_3, window_bounds = array<i64: 512, 128>}, {pipeline_mode = #tpu.pipeline_mode<synchronous>, transform_indices = @transform_4, window_bounds = array<i64: 1, 128>}, {pipeline_mode = #tpu.pipeline_mode<synchronous>, transform_indices = @transform_5, window_bounds = array<i64: 128, 128>}, {pipeline_mode = #tpu.pipeline_mode<synchronous>, transform_indices = @transform_6, window_bounds = array<i64: 1, 128>}, {transform_indices = @transform_7, window_bounds = array<i64: 8, 128>}]} {
    %c0 = arith.constant 0 : index
    %c0_0 = arith.constant 0 : index
    %0 = vector.load %arg1[%c0, %c0_0] : memref<8x256xbf16, #tpu.memory_space<vmem>>, vector<8x256xbf16>
    %c0_1 = arith.constant 0 : index
    %c0_2 = arith.constant 0 : index
    %1 = vector.load %arg2[%c0_1, %c0_2] : memref<256x512xbf16, #tpu.memory_space<vmem>>, vector<256x512xbf16>
    %cst = arith.constant dense<0.000000e+00> : vector<8x512xf32>
    %2 = tpu.matmul %0, %1, %cst {dimension_numbers = #tpu.dot_dimension_numbers<[1], [0], [0], [1], [0, 0, 1, 1], [], []>} : vector<8x256xbf16>, vector<256x512xbf16>, vector<8x512xf32> -> vector<8x512xf32>
    %c0_3 = arith.constant 0 : index
    %c0_4 = arith.constant 0 : index
    %3 = vector.load %arg3[%c0_3, %c0_4] : memref<1x512xf32, #tpu.memory_space<vmem>>, vector<1x512xf32>
    %4 = vector.broadcast %3 : vector<1x512xf32> to vector<8x512xf32>
    %5 = arith.addf %2, %4 : vector<8x512xf32>
    %cst_5 = arith.constant 0.000000e+00 : f32
    %6 = vector.broadcast %cst_5 : f32 to vector<8x512xf32>
    %7 = arith.maximumf %5, %6 : vector<8x512xf32>
    %8 = arith.truncf %7 : vector<8x512xf32> to vector<8x512xbf16>
    %c0_6 = arith.constant 0 : index
    %c0_7 = arith.constant 0 : index
    %9 = vector.load %arg4[%c0_6, %c0_7] : memref<512x128xbf16, #tpu.memory_space<vmem>>, vector<512x128xbf16>
    %cst_8 = arith.constant dense<0.000000e+00> : vector<8x128xf32>
    %10 = tpu.matmul %8, %9, %cst_8 {dimension_numbers = #tpu.dot_dimension_numbers<[1], [0], [0], [1], [0, 0, 1, 1], [], []>} : vector<8x512xbf16>, vector<512x128xbf16>, vector<8x128xf32> -> vector<8x128xf32>
    %c0_9 = arith.constant 0 : index
    %c0_10 = arith.constant 0 : index
    %11 = vector.load %arg5[%c0_9, %c0_10] : memref<1x128xf32, #tpu.memory_space<vmem>>, vector<1x128xf32>
    %12 = vector.broadcast %11 : vector<1x128xf32> to vector<8x128xf32>
    %13 = arith.addf %10, %12 : vector<8x128xf32>
    %cst_11 = arith.constant 0.000000e+00 : f32
    %14 = vector.broadcast %cst_11 : f32 to vector<8x128xf32>
    %15 = arith.maximumf %13, %14 : vector<8x128xf32>
    %16 = arith.truncf %15 : vector<8x128xf32> to vector<8x128xbf16>
    %c0_12 = arith.constant 0 : index
    %c0_13 = arith.constant 0 : index
    %17 = vector.load %arg6[%c0_12, %c0_13] : memref<128x128xbf16, #tpu.memory_space<vmem>>, vector<128x128xbf16>
    %cst_14 = arith.constant dense<0.000000e+00> : vector<8x128xf32>
    %18 = tpu.matmul %16, %17, %cst_14 {dimension_numbers = #tpu.dot_dimension_numbers<[1], [0], [0], [1], [0, 0, 1, 1], [], []>} : vector<8x128xbf16>, vector<128x128xbf16>, vector<8x128xf32> -> vector<8x128xf32>
    %c0_15 = arith.constant 0 : index
    %c0_16 = arith.constant 0 : index
    %19 = vector.load %arg7[%c0_15, %c0_16] : memref<1x128xf32, #tpu.memory_space<vmem>>, vector<1x128xf32>
    %20 = vector.broadcast %19 : vector<1x128xf32> to vector<8x128xf32>
    %21 = arith.addf %18, %20 : vector<8x128xf32>
    %c0_17 = arith.constant 0 : index
    %c0_18 = arith.constant 0 : index
    %22 = vector.load %arg8[%c0_17, %c0_18] : memref<8x128xf32, #tpu.memory_space<vmem>>, vector<8x128xf32>
    tpu.vector_store %arg8[%c0_17, %c0_18], %21 {strides = array<i32>} : memref<8x128xf32, #tpu.memory_space<vmem>>, vector<8x128xf32>,
    return
  }
  func.func @transform_0(%arg0: i32) -> (i32, i32) {
    %c0_i32 = arith.constant 0 : i32
    %c0_i32_0 = arith.constant 0 : i32
    return %arg0, %c0_i32 : i32, i32
  }
  func.func @transform_1(%arg0: i32) -> (i32, i32) {
    %c0_i32 = arith.constant 0 : i32
    %c0_i32_0 = arith.constant 0 : i32
    %c0_i32_1 = arith.constant 0 : i32
    return %c0_i32, %c0_i32_0 : i32, i32
  }
  func.func @transform_2(%arg0: i32) -> (i32, i32) {
    %c0_i32 = arith.constant 0 : i32
    %c0_i32_0 = arith.constant 0 : i32
    %c0_i32_1 = arith.constant 0 : i32
    return %c0_i32, %c0_i32_0 : i32, i32
  }
  func.func @transform_3(%arg0: i32) -> (i32, i32) {
    %c0_i32 = arith.constant 0 : i32
    %c0_i32_0 = arith.constant 0 : i32
    %c0_i32_1 = arith.constant 0 : i32
    return %c0_i32, %c0_i32_0 : i32, i32
  }
  func.func @transform_4(%arg0: i32) -> (i32, i32) {
    %c0_i32 = arith.constant 0 : i32
    %c0_i32_0 = arith.constant 0 : i32
    %c0_i32_1 = arith.constant 0 : i32
    return %c0_i32, %c0_i32_0 : i32, i32
  }
  func.func @transform_5(%arg0: i32) -> (i32, i32) {
    %c0_i32 = arith.constant 0 : i32
    %c0_i32_0 = arith.constant 0 : i32
    %c0_i32_1 = arith.constant 0 : i32
    return %c0_i32, %c0_i32_0 : i32, i32
  }
  func.func @transform_6(%arg0: i32) -> (i32, i32) {
    %c0_i32 = arith.constant 0 : i32
    %c0_i32_0 = arith.constant 0 : i32
    %c0_i32_1 = arith.constant 0 : i32
    return %c0_i32, %c0_i32_0 : i32, i32
  }
  func.func @transform_7(%arg0: i32) -> (i32, i32) {
    %c0_i32 = arith.constant 0 : i32
    %c0_i32_0 = arith.constant 0 : i32
    return %arg0, %c0_i32 : i32, i32
  }
}

</mosaic_0001>

<llo_original>
// kernel: tpu_custom_call.1
$region0: #{tpu_custom_call.1}
  #allocation0 [shape = 'u32[]', space=smem, size = 0x4, offset = 0x4, fixed_abs, tag = 'smem constant byte address 0x4 - core index']
  #allocation1 [shape = 'u32[144,128]{1,0:T(1,128)}', space=vmem, size = 0x12000, scoped, tag = 'internal scratch']
  %s0 = inlined_call_operand.hbm [shape: bf16[8,256], index: 0, kind: input, shape index: {}]
  %s1 = inlined_call_operand.hbm [shape: bf16[256,512], index: 1, kind: input, shape index: {}]
  %s2 = inlined_call_operand.hbm [shape: f32[1,512], index: 2, kind: input, shape index: {}]
  %s3 = inlined_call_operand.hbm [shape: bf16[512,128], index: 3, kind: input, shape index: {}]
  %s4 = inlined_call_operand.vmem [shape: f32[1,128], index: 4, kind: input, shape index: {}]
  %s5 = inlined_call_operand.hbm [shape: bf16[128,128], index: 5, kind: input, shape index: {}]
  %s6 = inlined_call_operand.vmem [shape: f32[1,128], index: 6, kind: input, shape index: {}]
  %s7 = inlined_call_operand.hbm [shape: f32[8,128], index: 7, kind: output, shape index: {}]
  %s8 = sld [smem:[#allocation0]]
  $region58: #{tpu_custom_call.1} parent=0
    _
  %s10 = ssub.s32 1, %s8
  %s11 = scalar_select 0, %s10, %s8
  $region1: #{tpu_custom_call.1} parent=0
    #allocation2 [shape = 'u8[4096]{0}', space=vmem, size = 0x1000, scoped, tag = 'input window, operand 0, single buffered']
    #allocation3 [shape = 's32[1]{0}', space=sflag, size = 0x4, scoped, tag = 'scoped memory for tpu_custom_call.1']
    #allocation4 [shape = 's32[1]{0}', space=sflag, size = 0x4, scoped, tag = 'scoped memory for tpu_custom_call.1']
    #allocation5 [shape = 'u8[262144]{0}', space=vmem, size = 0x40000, scoped, tag = 'input window, operand 1, single buffered']
    #allocation6 [shape = 's32[1]{0}', space=sflag, size = 0x4, scoped, tag = 'scoped memory for tpu_custom_call.1']
    #allocation7 [shape = 'u8[2048]{0}', space=vmem, size = 0x800, scoped, tag = 'input window, operand 2, single buffered']
    #allocation8 [shape = 'u8[131072]{0}', space=vmem, size = 0x20000, scoped, tag = 'input window, operand 3, single buffered']
    #allocation9 [shape = 's32[1]{0}', space=sflag, size = 0x4, scoped, tag = 'scoped memory for tpu_custom_call.1']
    #allocation10 [shape = 'u8[32768]{0}', space=vmem, size = 0x8000, scoped, tag = 'input window, operand 5, single buffered']
    #allocation11 [shape = 'u8[4096]{0}', space=vmem, size = 0x1000, scoped, tag = 'output window, operand 0, single buffered']
    %12 = vsyncpa [#allocation3], 0
    %13 = vsyncpa [#allocation6], 0
    %14 = vsyncpa [#allocation9], 0
    %15 = vsyncpa [#allocation4], 0
    // Predicated region
    $region2: #{tpu_custom_call.1} parent=1 // pred_check
      _
    $region3: #{tpu_custom_call.1} parent=1 // pred_check_branch
      %17 = sbr.rel (0) target = $region5
    $region4: #{tpu_custom_call.1} parent=1 // pred_region
      %s19 = ssub.s32 128, 128
      %20 = vsyncadd [#allocation3], %s19
      %s22 = sshll.u32 [#allocation2], 4
      %s23 = int_to_ptr.vmem [resolvable:$true] %s22
      %25 = dma.hbm_to_vmem [thread:$0]  %s0, 128, %s23, [#allocation3]
    $region5: #{tpu_custom_call.1} parent=1 // pred_fallthru
      _
    // Predicated region
    $region6: #{tpu_custom_call.1} parent=1 // pred_check
      _
    $region7: #{tpu_custom_call.1} parent=1 // pred_check_branch
      %27 = sbr.rel (0) target = $region9
    $region8: #{tpu_custom_call.1} parent=1 // pred_region
      %s29 = ssub.s32 8192, 8192
      %30 = vsyncadd [#allocation6], %s29
      %s31 = sshll.u32 [#allocation5], 4
      %s32 = int_to_ptr.vmem [resolvable:$true] %s31
      %37 = dma.hbm_to_vmem [thread:$0]  %s1, 8192, %s32, [#allocation6], 256, 256, 16
    $region9: #{tpu_custom_call.1} parent=1 // pred_fallthru
      _
    // Predicated region
    $region10: #{tpu_custom_call.1} parent=1 // pred_check
      _
    $region11: #{tpu_custom_call.1} parent=1 // pred_check_branch
      %39 = sbr.rel (0) target = $region13
    $region12: #{tpu_custom_call.1} parent=1 // pred_region
      %s41 = ssub.s32 64, 64
      %42 = vsyncadd [#allocation6], %s41
      %s44 = sshll.u32 [#allocation7], 4
      %s45 = int_to_ptr.vmem [resolvable:$true] %s44
      %47 = dma.hbm_to_vmem [thread:$0]  %s2, 64, %s45, [#allocation6]
    $region13: #{tpu_custom_call.1} parent=1 // pred_fallthru
      _
    // Predicated region
    $region14: #{tpu_custom_call.1} parent=1 // pred_check
      _
    $region15: #{tpu_custom_call.1} parent=1 // pred_check_branch
      %49 = sbr.rel (0) target = $region17
    $region16: #{tpu_custom_call.1} parent=1 // pred_region
      %s51 = ssub.s32 4096, 4096
      %52 = vsyncadd [#allocation9], %s51
      %s53 = sshll.u32 [#allocation8], 4
      %s54 = int_to_ptr.vmem [resolvable:$true] %s53
      %59 = dma.hbm_to_vmem [thread:$0]  %s3, 4096, %s54, [#allocation9], 64, 64, 4
    $region17: #{tpu_custom_call.1} parent=1 // pred_fallthru
      _
    // Predicated region
    $region18: #{tpu_custom_call.1} parent=1 // pred_check
      _
    $region19: #{tpu_custom_call.1} parent=1 // pred_check_branch
      %61 = sbr.rel (0) target = $region21
    $region20: #{tpu_custom_call.1} parent=1 // pred_region
      _
    $region21: #{tpu_custom_call.1} parent=1 // pred_fallthru
      _
    // Predicated region
    $region22: #{tpu_custom_call.1} parent=1 // pred_check
      _
    $region23: #{tpu_custom_call.1} parent=1 // pred_check_branch
      %63 = sbr.rel (0) target = $region25
    $region24: #{tpu_custom_call.1} parent=1 // pred_region
      %s65 = ssub.s32 1024, 1024
      %66 = vsyncadd [#allocation9], %s65
      %s67 = sshll.u32 [#allocation10], 4
      %s68 = int_to_ptr.vmem [resolvable:$true] %s67
      %73 = dma.hbm_to_vmem [thread:$0]  %s5, 1024, %s68, [#allocation9], 64, 64, 4
    $region25: #{tpu_custom_call.1} parent=1 // pred_fallthru
      _
    // Predicated region
    $region26: #{tpu_custom_call.1} parent=1 // pred_check
      _
    $region27: #{tpu_custom_call.1} parent=1 // pred_check_branch
      %75 = sbr.rel (0) target = $region29
    $region28: #{tpu_custom_call.1} parent=1 // pred_region
      _
    $region29: #{tpu_custom_call.1} parent=1 // pred_fallthru
      _
    // Predicated region
    $region30: #{tpu_custom_call.1} parent=1 // pred_check
      _
    $region31: #{tpu_custom_call.1} parent=1 // pred_check_branch
      %77 = sbr.rel (0) target = $region33
    $region32: #{tpu_custom_call.1} parent=1 // pred_region
      %78 = dma.done [#allocation3], 128
    $region33: #{tpu_custom_call.1} parent=1 // pred_fallthru
      _
    // Predicated region
    $region34: #{tpu_custom_call.1} parent=1 // pred_check
      _
    $region35: #{tpu_custom_call.1} parent=1 // pred_check_branch
      %80 = sbr.rel (0) target = $region37
    $region36: #{tpu_custom_call.1} parent=1 // pred_region
      %81 = dma.done [#allocation6], 8192
    $region37: #{tpu_custom_call.1} parent=1 // pred_fallthru
      _
    // Predicated region
    $region38: #{tpu_custom_call.1} parent=1 // pred_check
      _
    $region39: #{tpu_custom_call.1} parent=1 // pred_check_branch
      %83 = sbr.rel (0) target = $region41
    $region40: #{tpu_custom_call.1} parent=1 // pred_region
      %84 = dma.done [#allocation6], 64
    $region41: #{tpu_custom_call.1} parent=1 // pred_fallthru
      _
    // Predicated region
    $region42: #{tpu_custom_call.1} parent=1 // pred_check
      _
    $region43: #{tpu_custom_call.1} parent=1 // pred_check_branch
      %86 = sbr.rel (0) target = $region45
    $region44: #{tpu_custom_call.1} parent=1 // pred_region
      %87 = dma.done [#allocation9], 4096
    $region45: #{tpu_custom_call.1} parent=1 // pred_fallthru
      _
    // Predicated region
    $region46: #{tpu_custom_call.1} parent=1 // pred_check
      _
    $region47: #{tpu_custom_call.1} parent=1 // pred_check_branch
      %89 = sbr.rel (0) target = $region49
    $region48: #{tpu_custom_call.1} parent=1 // pred_region
      %90 = dma.done [#allocation9], 1024
    $region49: #{tpu_custom_call.1} parent=1 // pred_fallthru
      _
    %v92 = vld [vmem:[#allocation2] sm:$0xff]
    %v93 = vld [vmem:[#allocation5] sm:$0xff]
    %v94 = vld [vmem:[#allocation5 + $0x8] sm:$0xff]
    %v95 = vld [vmem:[#allocation5 + $0x10] sm:$0xff]
    %v96 = vld [vmem:[#allocation5 + $0x18] sm:$0xff]
    %v97 = vld [vmem:[#allocation5 + $0x20] sm:$0xff]
    %v98 = vld [vmem:[#allocation5 + $0x28] sm:$0xff]
    %v99 = vld [vmem:[#allocation5 + $0x30] sm:$0xff]
    %v100 = vld [vmem:[#allocation5 + $0x38] sm:$0xff]
    %v101 = vld [vmem:[#allocation5 + $0x40] sm:$0xff]
    %v102 = vld [vmem:[#allocation5 + $0x48] sm:$0xff]
    %v103 = vld [vmem:[#allocation5 + $0x50] sm:$0xff]
    %v104 = vld [vmem:[#allocation5 + $0x58] sm:$0xff]
    %v105 = vld [vmem:[#allocation5 + $0x60] sm:$0xff]
    %v106 = vld [vmem:[#allocation5 + $0x68] sm:$0xff]
    %v107 = vld [vmem:[#allocation5 + $0x70] sm:$0xff]
    %v108 = vld [vmem:[#allocation5 + $0x78] sm:$0xff]
    %v109 = vld [vmem:[#allocation5 + $0x80] sm:$0xff]
    %v110 = vld [vmem:[#allocation5 + $0x88] sm:$0xff]
    %v111 = vld [vmem:[#allocation5 + $0x90] sm:$0xff]
    %v112 = vld [vmem:[#allocation5 + $0x98] sm:$0xff]
    %v113 = vld [vmem:[#allocation5 + $0xa0] sm:$0xff]
    %v114 = vld [vmem:[#allocation5 + $0xa8] sm:$0xff]
    %v115 = vld [vmem:[#allocation5 + $0xb0] sm:$0xff]
    %v116 = vld [vmem:[#allocation5 + $0xb8] sm:$0xff]
    %v117 = vld [vmem:[#allocation5 + $0xc0] sm:$0xff]
    %v118 = vld [vmem:[#allocation5 + $0xc8] sm:$0xff]
    %v119 = vld [vmem:[#allocation5 + $0xd0] sm:$0xff]
    %v120 = vld [vmem:[#allocation5 + $0xd8] sm:$0xff]
    %v121 = vld [vmem:[#allocation5 + $0xe0] sm:$0xff]
    %v122 = vld [vmem:[#allocation5 + $0xe8] sm:$0xff]
    %v123 = vld [vmem:[#allocation5 + $0xf0] sm:$0xff]
    %v124 = vld [vmem:[#allocation5 + $0xf8] sm:$0xff]
    %v125 = vld [vmem:[#allocation5 + $0x100] sm:$0xff]
    %v126 = vld [vmem:[#allocation5 + $0x108] sm:$0xff]
    %v127 = vld [vmem:[#allocation5 + $0x110] sm:$0xff]
    %v128 = vld [vmem:[#allocation5 + $0x118] sm:$0xff]
    %v129 = vld [vmem:[#allocation5 + $0x120] sm:$0xff]
    %v130 = vld [vmem:[#allocation5 + $0x128] sm:$0xff]
    %v131 = vld [vmem:[#allocation5 + $0x130] sm:$0xff]
    %v132 = vld [vmem:[#allocation5 + $0x138] sm:$0xff]
    %v133 = vld [vmem:[#allocation5 + $0x140] sm:$0xff]
    %v134 = vld [vmem:[#allocation5 + $0x148] sm:$0xff]
    %v135 = vld [vmem:[#allocation5 + $0x150] sm:$0xff]
    %v136 = vld [vmem:[#allocation5 + $0x158] sm:$0xff]
    %v137 = vld [vmem:[#allocation5 + $0x160] sm:$0xff]
    %v138 = vld [vmem:[#allocation5 + $0x168] sm:$0xff]
    %v139 = vld [vmem:[#allocation5 + $0x170] sm:$0xff]
    %v140 = vld [vmem:[#allocation5 + $0x178] sm:$0xff]
    %v141 = vld [vmem:[#allocation5 + $0x180] sm:$0xff]
    %v142 = vld [vmem:[#allocation5 + $0x188] sm:$0xff]
    %v143 = vld [vmem:[#allocation5 + $0x190] sm:$0xff]
    %v144 = vld [vmem:[#allocation5 + $0x198] sm:$0xff]
    %v145 = vld [vmem:[#allocation5 + $0x1a0] sm:$0xff]
    %v146 = vld [vmem:[#allocation5 + $0x1a8] sm:$0xff]
    %v147 = vld [vmem:[#allocation5 + $0x1b0] sm:$0xff]
    %v148 = vld [vmem:[#allocation5 + $0x1b8] sm:$0xff]
    %v149 = vld [vmem:[#allocation5 + $0x1c0] sm:$0xff]
    %v150 = vld [vmem:[#allocation5 + $0x1c8] sm:$0xff]
    %v151 = vld [vmem:[#allocation5 + $0x1d0] sm:$0xff]
    %v152 = vld [vmem:[#allocation5 + $0x1d8] sm:$0xff]
    %v153 = vld [vmem:[#allocation5 + $0x1e0] sm:$0xff]
    %v154 = vld [vmem:[#allocation5 + $0x1e8] sm:$0xff]
    %v155 = vld [vmem:[#allocation5 + $0x1f0] sm:$0xff]
    %v156 = vld [vmem:[#allocation5 + $0x1f8] sm:$0xff]
    %v157 = vld [vmem:[#allocation7] sm:$0xf]
    %v159 = vlaneseq
    %v160 = vshrl.u32 %v159, 7
    %v161 = vsub.s32 0, %v160
    %v162 = vrot.slane %v157, %v161
    %v163 = vlaneseq
    %v164 = vshrl.u32 %v163, 7
    %v165 = vsub.s32 1, %v164
    %v166 = vrot.slane %v157, %v165
    %v167 = vlaneseq
    %v168 = vshrl.u32 %v167, 7
    %v169 = vsub.s32 2, %v168
    %v170 = vrot.slane %v157, %v169
    %v171 = vlaneseq
    %v172 = vshrl.u32 %v171, 7
    %v173 = vsub.s32 3, %v172
    %v174 = vrot.slane %v157, %v173
    %v180 = vunpack.c.l.b16 %v92
    %v181 = vunpack.c.h.b16 %v92
    %v182 = vpack.c.b16 %v180, %v180
    %v183 = vpack.c.b16 %v181, %v181
    %v250 = vunpack.c.l.b16 %v93
    %v251 = vunpack.c.h.b16 %v93
    %v252 = vunpack.c.l.b16 %v94
    %v253 = vunpack.c.h.b16 %v94
    %v254 = vunpack.c.l.b16 %v95
    %v255 = vunpack.c.h.b16 %v95
    %v256 = vunpack.c.l.b16 %v96
    %v257 = vunpack.c.h.b16 %v96
    %v258 = vunpack.c.l.b16 %v97
    %v259 = vunpack.c.h.b16 %v97
    %v260 = vunpack.c.l.b16 %v98
    %v261 = vunpack.c.h.b16 %v98
    %v262 = vunpack.c.l.b16 %v99
    %v263 = vunpack.c.h.b16 %v99
    %v264 = vunpack.c.l.b16 %v100
    %v265 = vunpack.c.h.b16 %v100
    %v266 = vunpack.c.l.b16 %v101
    %v267 = vunpack.c.h.b16 %v101
    %v268 = vunpack.c.l.b16 %v102
    %v269 = vunpack.c.h.b16 %v102
    %v270 = vunpack.c.l.b16 %v103
    %v271 = vunpack.c.h.b16 %v103
    %v272 = vunpack.c.l.b16 %v104
    %v273 = vunpack.c.h.b16 %v104
    %v274 = vunpack.c.l.b16 %v105
    %v275 = vunpack.c.h.b16 %v105
    %v276 = vunpack.c.l.b16 %v106
    %v277 = vunpack.c.h.b16 %v106
    %v278 = vunpack.c.l.b16 %v107
    %v279 = vunpack.c.h.b16 %v107
    %v280 = vunpack.c.l.b16 %v108
    %v281 = vunpack.c.h.b16 %v108
    %v282 = vunpack.c.l.b16 %v109
    %v283 = vunpack.c.h.b16 %v109
    %v284 = vunpack.c.l.b16 %v110
    %v285 = vunpack.c.h.b16 %v110
    %v286 = vunpack.c.l.b16 %v111
    %v287 = vunpack.c.h.b16 %v111
    %v288 = vunpack.c.l.b16 %v112
    %v289 = vunpack.c.h.b16 %v112
    %v290 = vunpack.c.l.b16 %v113
    %v291 = vunpack.c.h.b16 %v113
    %v292 = vunpack.c.l.b16 %v114
    %v293 = vunpack.c.h.b16 %v114
    %v294 = vunpack.c.l.b16 %v115
    %v295 = vunpack.c.h.b16 %v115
    %v296 = vunpack.c.l.b16 %v116
    %v297 = vunpack.c.h.b16 %v116
    %v298 = vunpack.c.l.b16 %v117
    %v299 = vunpack.c.h.b16 %v117
    %v300 = vunpack.c.l.b16 %v118
    %v301 = vunpack.c.h.b16 %v118
    %v302 = vunpack.c.l.b16 %v119
    %v303 = vunpack.c.h.b16 %v119
    %v304 = vunpack.c.l.b16 %v120
    %v305 = vunpack.c.h.b16 %v120
    %v306 = vunpack.c.l.b16 %v121
    %v307 = vunpack.c.h.b16 %v121
    %v308 = vunpack.c.l.b16 %v122
    %v309 = vunpack.c.h.b16 %v122
    %v310 = vunpack.c.l.b16 %v123
    %v311 = vunpack.c.h.b16 %v123
    %v312 = vunpack.c.l.b16 %v124
    %v313 = vunpack.c.h.b16 %v124
    %v314 = vunpack.c.l.b16 %v125
    %v315 = vunpack.c.h.b16 %v125
    %v316 = vunpack.c.l.b16 %v126
    %v317 = vunpack.c.h.b16 %v126
    %v318 = vunpack.c.l.b16 %v127
    %v319 = vunpack.c.h.b16 %v127
    %v320 = vunpack.c.l.b16 %v128
    %v321 = vunpack.c.h.b16 %v128
    %v322 = vunpack.c.l.b16 %v129
    %v323 = vunpack.c.h.b16 %v129
    %v324 = vunpack.c.l.b16 %v130
    %v325 = vunpack.c.h.b16 %v130
    %v326 = vunpack.c.l.b16 %v131
    %v327 = vunpack.c.h.b16 %v131
    %v328 = vunpack.c.l.b16 %v132
    %v329 = vunpack.c.h.b16 %v132
    %v330 = vunpack.c.l.b16 %v133
    %v331 = vunpack.c.h.b16 %v133
    %v332 = vunpack.c.l.b16 %v134
    %v333 = vunpack.c.h.b16 %v134
    %v334 = vunpack.c.l.b16 %v135
    %v335 = vunpack.c.h.b16 %v135
    %v336 = vunpack.c.l.b16 %v136
    %v337 = vunpack.c.h.b16 %v136
    %v338 = vunpack.c.l.b16 %v137
    %v339 = vunpack.c.h.b16 %v137
    %v340 = vunpack.c.l.b16 %v138
    %v341 = vunpack.c.h.b16 %v138
    %v342 = vunpack.c.l.b16 %v139
    %v343 = vunpack.c.h.b16 %v139
    %v344 = vunpack.c.l.b16 %v140
    %v345 = vunpack.c.h.b16 %v140
    %v346 = vunpack.c.l.b16 %v141
    %v347 = vunpack.c.h.b16 %v141
    %v348 = vunpack.c.l.b16 %v142
    %v349 = vunpack.c.h.b16 %v142
    %v350 = vunpack.c.l.b16 %v143
    %v351 = vunpack.c.h.b16 %v143
    %v352 = vunpack.c.l.b16 %v144
    %v353 = vunpack.c.h.b16 %v144
    %v354 = vunpack.c.l.b16 %v145
    %v355 = vunpack.c.h.b16 %v145
    %v356 = vunpack.c.l.b16 %v146
    %v357 = vunpack.c.h.b16 %v146
    %v358 = vunpack.c.l.b16 %v147
    %v359 = vunpack.c.h.b16 %v147
    %v360 = vunpack.c.l.b16 %v148
    %v361 = vunpack.c.h.b16 %v148
    %v362 = vunpack.c.l.b16 %v149
    %v363 = vunpack.c.h.b16 %v149
    %v364 = vunpack.c.l.b16 %v150
    %v365 = vunpack.c.h.b16 %v150
    %v366 = vunpack.c.l.b16 %v151
    %v367 = vunpack.c.h.b16 %v151
    %v368 = vunpack.c.l.b16 %v152
    %v369 = vunpack.c.h.b16 %v152
    %v370 = vunpack.c.l.b16 %v153
    %v371 = vunpack.c.h.b16 %v153
    %v372 = vunpack.c.l.b16 %v154
    %v373 = vunpack.c.h.b16 %v154
    %v374 = vunpack.c.l.b16 %v155
    %v375 = vunpack.c.h.b16 %v155
    %v376 = vunpack.c.l.b16 %v156
    %v377 = vunpack.c.h.b16 %v156
    %v378 = vpack.c.b16 %v254, %v250
    %v379 = vpack.c.b16 %v255, %v251
    %v380 = vpack.c.b16 %v256, %v252
    %v381 = vpack.c.b16 %v257, %v253
    %v382 = vpack.c.b16 %v262, %v258
    %v383 = vpack.c.b16 %v263, %v259
    %v384 = vpack.c.b16 %v264, %v260
    %v385 = vpack.c.b16 %v265, %v261
    %v386 = vpack.c.b16 %v270, %v266
    %v387 = vpack.c.b16 %v271, %v267
    %v388 = vpack.c.b16 %v272, %v268
    %v389 = vpack.c.b16 %v273, %v269
    %v390 = vpack.c.b16 %v278, %v274
    %v391 = vpack.c.b16 %v279, %v275
    %v392 = vpack.c.b16 %v280, %v276
    %v393 = vpack.c.b16 %v281, %v277
    %v394 = vpack.c.b16 %v286, %v282
    %v395 = vpack.c.b16 %v287, %v283
    %v396 = vpack.c.b16 %v288, %v284
    %v397 = vpack.c.b16 %v289, %v285
    %v398 = vpack.c.b16 %v294, %v290
    %v399 = vpack.c.b16 %v295, %v291
    %v400 = vpack.c.b16 %v296, %v292
    %v401 = vpack.c.b16 %v297, %v293
    %v402 = vpack.c.b16 %v302, %v298
    %v403 = vpack.c.b16 %v303, %v299
    %v404 = vpack.c.b16 %v304, %v300
    %v405 = vpack.c.b16 %v305, %v301
    %v406 = vpack.c.b16 %v310, %v306
    %v407 = vpack.c.b16 %v311, %v307
    %v408 = vpack.c.b16 %v312, %v308
    %v409 = vpack.c.b16 %v313, %v309
    %v410 = vpack.c.b16 %v318, %v314
    %v411 = vpack.c.b16 %v319, %v315
    %v412 = vpack.c.b16 %v320, %v316
    %v413 = vpack.c.b16 %v321, %v317
    %v414 = vpack.c.b16 %v326, %v322
    %v415 = vpack.c.b16 %v327, %v323
    %v416 = vpack.c.b16 %v328, %v324
    %v417 = vpack.c.b16 %v329, %v325
    %v418 = vpack.c.b16 %v334, %v330
    %v419 = vpack.c.b16 %v335, %v331
    %v420 = vpack.c.b16 %v336, %v332
    %v421 = vpack.c.b16 %v337, %v333
    %v422 = vpack.c.b16 %v342, %v338
    %v423 = vpack.c.b16 %v343, %v339
    %v424 = vpack.c.b16 %v344, %v340
    %v425 = vpack.c.b16 %v345, %v341
    %v426 = vpack.c.b16 %v350, %v346
    %v427 = vpack.c.b16 %v351, %v347
    %v428 = vpack.c.b16 %v352, %v348
    %v429 = vpack.c.b16 %v353, %v349
    %v430 = vpack.c.b16 %v358, %v354
    %v431 = vpack.c.b16 %v359, %v355
    %v432 = vpack.c.b16 %v360, %v356
    %v433 = vpack.c.b16 %v361, %v357
    %v434 = vpack.c.b16 %v366, %v362
    %v435 = vpack.c.b16 %v367, %v363
    %v436 = vpack.c.b16 %v368, %v364
    %v437 = vpack.c.b16 %v369, %v365
    %v438 = vpack.c.b16 %v374, %v370
    %v439 = vpack.c.b16 %v375, %v371
    %v440 = vpack.c.b16 %v376, %v372
    %v441 = vpack.c.b16 %v377, %v373
    %506 = vmatprep.subr.bf16.mxu0 %v407
    %507 = vmatpush1.bf16.msra.mxu0 %v406
    %508 = vmatprep.subr.bf16.mxu0 %v403
    %509 = vmatpush1.bf16.msra.mxu0 %v402
    %510 = vmatprep.subr.bf16.mxu0 %v399
    %511 = vmatpush1.bf16.msra.mxu0 %v398
    %512 = vmatprep.subr.bf16.mxu0 %v395
    %513 = vmatpush1.bf16.msra.mxu0 %v394
    %514 = vmatprep.subr.bf16.mxu0 %v391
    %515 = vmatpush1.bf16.msra.mxu0 %v390
    %516 = vmatprep.subr.bf16.mxu0 %v387
    %517 = vmatpush1.bf16.msra.mxu0 %v386
    %518 = vmatprep.subr.bf16.mxu0 %v383
    %519 = vmatpush1.bf16.msra.mxu0 %v382
    %520 = vmatprep.subr.bf16.mxu0 %v379
    %521 = vmatpush1.bf16.msra.mxu0 %v378
    %522 = vmatprep.subr.bf16.mxu0 %v439
    %523 = vmatpush2.bf16.msra.mxu0 %v438
    %524 = vmatprep.subr.bf16.mxu0 %v435
    %525 = vmatpush2.bf16.msra.mxu0 %v434
    %526 = vmatprep.subr.bf16.mxu0 %v431
    %527 = vmatpush2.bf16.msra.mxu0 %v430
    %528 = vmatprep.subr.bf16.mxu0 %v427
    %529 = vmatpush2.bf16.msra.mxu0 %v426
    %530 = vmatprep.subr.bf16.mxu0 %v423
    %531 = vmatpush2.bf16.msra.mxu0 %v422
    %532 = vmatprep.subr.bf16.mxu0 %v419
    %533 = vmatpush2.bf16.msra.mxu0 %v418
    %534 = vmatprep.subr.bf16.mxu0 %v415
    %535 = vmatpush2.bf16.msra.mxu0 %v414
    %536 = vmatprep.subr.bf16.mxu0 %v411
    %537 = vmatpush2.bf16.msra.mxu0 %v410
    %538 = vmatprep.mubr.bf16.mxu0 %v183
    %539 = vmatmul.mubr.bf16.gmra.mxu0 %v182
    %v540 = vpop.f32.mrf.mxu0
    %v541 = vadd.f32 %v162, %v540
    %v542 = vpop.f32.mrf.mxu0
    %v543 = vadd.f32 %v166, %v542
    %v544 = vpop.f32.mrf.mxu0
    %v545 = vpop.f32.mrf.mxu0
    %546 = vdwg.mxu0
    %547 = vmatprep.subr.bf16.mxu0 %v409
    %548 = vmatpush1.bf16.msra.mxu0 %v408
    %549 = vmatprep.subr.bf16.mxu0 %v405
    %550 = vmatpush1.bf16.msra.mxu0 %v404
    %551 = vmatprep.subr.bf16.mxu0 %v401
    %552 = vmatpush1.bf16.msra.mxu0 %v400
    %553 = vmatprep.subr.bf16.mxu0 %v397
    %554 = vmatpush1.bf16.msra.mxu0 %v396
    %555 = vmatprep.subr.bf16.mxu0 %v393
    %556 = vmatpush1.bf16.msra.mxu0 %v392
    %557 = vmatprep.subr.bf16.mxu0 %v389
    %558 = vmatpush1.bf16.msra.mxu0 %v388
    %559 = vmatprep.subr.bf16.mxu0 %v385
    %560 = vmatpush1.bf16.msra.mxu0 %v384
    %561 = vmatprep.subr.bf16.mxu0 %v381
    %562 = vmatpush1.bf16.msra.mxu0 %v380
    %563 = vmatprep.subr.bf16.mxu0 %v441
    %564 = vmatpush2.bf16.msra.mxu0 %v440
    %565 = vmatprep.subr.bf16.mxu0 %v437
    %566 = vmatpush2.bf16.msra.mxu0 %v436
    %567 = vmatprep.subr.bf16.mxu0 %v433
    %568 = vmatpush2.bf16.msra.mxu0 %v432
    %569 = vmatprep.subr.bf16.mxu0 %v429
    %570 = vmatpush2.bf16.msra.mxu0 %v428
    %571 = vmatprep.subr.bf16.mxu0 %v425
    %572 = vmatpush2.bf16.msra.mxu0 %v424
    %573 = vmatprep.subr.bf16.mxu0 %v421
    %574 = vmatpush2.bf16.msra.mxu0 %v420
    %575 = vmatprep.subr.bf16.mxu0 %v417
    %576 = vmatpush2.bf16.msra.mxu0 %v416
    %577 = vmatprep.subr.bf16.mxu0 %v413
    %578 = vmatpush2.bf16.msra.mxu0 %v412
    %579 = vmatprep.mubr.bf16.mxu0 %v183
    %580 = vmatmul.mubr.bf16.gmra.mxu0 %v182
    %v581 = vpop.f32.mrf.mxu0
    %v582 = vadd.f32 %v170, %v581
    %v583 = vpop.f32.mrf.mxu0
    %v584 = vadd.f32 %v174, %v583
    %v585 = vpop.f32.mrf.mxu0
    %v586 = vpop.f32.mrf.mxu0
    %587 = vdwg.mxu0
    %v588 = vmax.f32 %v541, 0.0
    %v589 = vmax.f32 %v543, 0.0
    %v590 = vmax.f32 %v582, 0.0
    %v591 = vmax.f32 %v584, 0.0
    %v592 = vpack.c.bf16 %v588, %v588
    %v593 = vpack.c.bf16 %v589, %v589
    %v594 = vpack.c.bf16 %v590, %v590
    %v595 = vpack.c.bf16 %v591, %v591
    %v596 = vld [vmem:[#allocation8] sm:$0xf]
    %v597 = vld [vmem:[#allocation8 + $0x4] sm:$0xf]
    %v598 = vld [vmem:[#allocation8 + $0x8] sm:$0xf]
    %v599 = vld [vmem:[#allocation8 + $0xc] sm:$0xf]
    %v600 = vld [vmem:[#allocation8 + $0x10] sm:$0xf]
    %v601 = vld [vmem:[#allocation8 + $0x14] sm:$0xf]
    %v602 = vld [vmem:[#allocation8 + $0x18] sm:$0xf]
    %v603 = vld [vmem:[#allocation8 + $0x1c] sm:$0xf]
    %v604 = vld [vmem:[#allocation8 + $0x20] sm:$0xf]
    %v605 = vld [vmem:[#allocation8 + $0x24] sm:$0xf]
    %v606 = vld [vmem:[#allocation8 + $0x28] sm:$0xf]
    %v607 = vld [vmem:[#allocation8 + $0x2c] sm:$0xf]
    %v608 = vld [vmem:[#allocation8 + $0x30] sm:$0xf]
    %v609 = vld [vmem:[#allocation8 + $0x34] sm:$0xf]
    %v610 = vld [vmem:[#allocation8 + $0x38] sm:$0xf]
    %v611 = vld [vmem:[#allocation8 + $0x3c] sm:$0xf]
    %v612 = vld [vmem:[#allocation8 + $0x40] sm:$0xf]
    %v613 = vld [vmem:[#allocation8 + $0x44] sm:$0xf]
    %v614 = vld [vmem:[#allocation8 + $0x48] sm:$0xf]
    %v615 = vld [vmem:[#allocation8 + $0x4c] sm:$0xf]
    %v616 = vld [vmem:[#allocation8 + $0x50] sm:$0xf]
    %v617 = vld [vmem:[#allocation8 + $0x54] sm:$0xf]
    %v618 = vld [vmem:[#allocation8 + $0x58] sm:$0xf]
    %v619 = vld [vmem:[#allocation8 + $0x5c] sm:$0xf]
    %v620 = vld [vmem:[#allocation8 + $0x60] sm:$0xf]
    %v621 = vld [vmem:[#allocation8 + $0x64] sm:$0xf]
    %v622 = vld [vmem:[#allocation8 + $0x68] sm:$0xf]
    %v623 = vld [vmem:[#allocation8 + $0x6c] sm:$0xf]
    %v624 = vld [vmem:[#allocation8 + $0x70] sm:$0xf]
    %v625 = vld [vmem:[#allocation8 + $0x74] sm:$0xf]
    %v626 = vld [vmem:[#allocation8 + $0x78] sm:$0xf]
    %v627 = vld [vmem:[#allocation8 + $0x7c] sm:$0xf]
    %v628 = vld [vmem:[#allocation8 + $0x80] sm:$0xf]
    %v629 = vld [vmem:[#allocation8 + $0x84] sm:$0xf]
    %v630 = vld [vmem:[#allocation8 + $0x88] sm:$0xf]
    %v631 = vld [vmem:[#allocation8 + $0x8c] sm:$0xf]
    %v632 = vld [vmem:[#allocation8 + $0x90] sm:$0xf]
    %v633 = vld [vmem:[#allocation8 + $0x94] sm:$0xf]
    %v634 = vld [vmem:[#allocation8 + $0x98] sm:$0xf]
    %v635 = vld [vmem:[#allocation8 + $0x9c] sm:$0xf]
    %v636 = vld [vmem:[#allocation8 + $0xa0] sm:$0xf]
    %v637 = vld [vmem:[#allocation8 + $0xa4] sm:$0xf]
    %v638 = vld [vmem:[#allocation8 + $0xa8] sm:$0xf]
    %v639 = vld [vmem:[#allocation8 + $0xac] sm:$0xf]
    %v640 = vld [vmem:[#allocation8 + $0xb0] sm:$0xf]
    %v641 = vld [vmem:[#allocation8 + $0xb4] sm:$0xf]
    %v642 = vld [vmem:[#allocation8 + $0xb8] sm:$0xf]
    %v643 = vld [vmem:[#allocation8 + $0xbc] sm:$0xf]
    %v644 = vld [vmem:[#allocation8 + $0xc0] sm:$0xf]
    %v645 = vld [vmem:[#allocation8 + $0xc4] sm:$0xf]
    %v646 = vld [vmem:[#allocation8 + $0xc8] sm:$0xf]
    %v647 = vld [vmem:[#allocation8 + $0xcc] sm:$0xf]
    %v648 = vld [vmem:[#allocation8 + $0xd0] sm:$0xf]
    %v649 = vld [vmem:[#allocation8 + $0xd4] sm:$0xf]
    %v650 = vld [vmem:[#allocation8 + $0xd8] sm:$0xf]
    %v651 = vld [vmem:[#allocation8 + $0xdc] sm:$0xf]
    %v652 = vld [vmem:[#allocation8 + $0xe0] sm:$0xf]
    %v653 = vld [vmem:[#allocation8 + $0xe4] sm:$0xf]
    %v654 = vld [vmem:[#allocation8 + $0xe8] sm:$0xf]
    %v655 = vld [vmem:[#allocation8 + $0xec] sm:$0xf]
    %v656 = vld [vmem:[#allocation8 + $0xf0] sm:$0xf]
    %v657 = vld [vmem:[#allocation8 + $0xf4] sm:$0xf]
    %v658 = vld [vmem:[#allocation8 + $0xf8] sm:$0xf]
    %v659 = vld [vmem:[#allocation8 + $0xfc] sm:$0xf]
    %v660 = vld [vmem:[%s4] sm:$0x1]
    %v662 = vlaneseq
    %v663 = vshrl.u32 %v662, 7
    %v664 = vsub.s32 0, %v663
    %v665 = vrot.slane %v660, %v664
    %v731 = vunpack.c.l.b16 %v596
    %v732 = vunpack.c.l.b16 %v597
    %v733 = vunpack.c.l.b16 %v598
    %v734 = vunpack.c.l.b16 %v599
    %v735 = vunpack.c.l.b16 %v600
    %v736 = vunpack.c.l.b16 %v601
    %v737 = vunpack.c.l.b16 %v602
    %v738 = vunpack.c.l.b16 %v603
    %v739 = vunpack.c.l.b16 %v604
    %v740 = vunpack.c.l.b16 %v605
    %v741 = vunpack.c.l.b16 %v606
    %v742 = vunpack.c.l.b16 %v607
    %v743 = vunpack.c.l.b16 %v608
    %v744 = vunpack.c.l.b16 %v609
    %v745 = vunpack.c.l.b16 %v610
    %v746 = vunpack.c.l.b16 %v611
    %v747 = vunpack.c.l.b16 %v612
    %v748 = vunpack.c.l.b16 %v613
    %v749 = vunpack.c.l.b16 %v614
    %v750 = vunpack.c.l.b16 %v615
    %v751 = vunpack.c.l.b16 %v616
    %v752 = vunpack.c.l.b16 %v617
    %v753 = vunpack.c.l.b16 %v618
    %v754 = vunpack.c.l.b16 %v619
    %v755 = vunpack.c.l.b16 %v620
    %v756 = vunpack.c.l.b16 %v621
    %v757 = vunpack.c.l.b16 %v622
    %v758 = vunpack.c.l.b16 %v623
    %v759 = vunpack.c.l.b16 %v624
    %v760 = vunpack.c.l.b16 %v625
    %v761 = vunpack.c.l.b16 %v626
    %v762 = vunpack.c.l.b16 %v627
    %v763 = vunpack.c.l.b16 %v628
    %v764 = vunpack.c.l.b16 %v629
    %v765 = vunpack.c.l.b16 %v630
    %v766 = vunpack.c.l.b16 %v631
    %v767 = vunpack.c.l.b16 %v632
    %v768 = vunpack.c.l.b16 %v633
    %v769 = vunpack.c.l.b16 %v634
    %v770 = vunpack.c.l.b16 %v635
    %v771 = vunpack.c.l.b16 %v636
    %v772 = vunpack.c.l.b16 %v637
    %v773 = vunpack.c.l.b16 %v638
    %v774 = vunpack.c.l.b16 %v639
    %v775 = vunpack.c.l.b16 %v640
    %v776 = vunpack.c.l.b16 %v641
    %v777 = vunpack.c.l.b16 %v642
    %v778 = vunpack.c.l.b16 %v643
    %v779 = vunpack.c.l.b16 %v644
    %v780 = vunpack.c.l.b16 %v645
    %v781 = vunpack.c.l.b16 %v646
    %v782 = vunpack.c.l.b16 %v647
    %v783 = vunpack.c.l.b16 %v648
    %v784 = vunpack.c.l.b16 %v649
    %v785 = vunpack.c.l.b16 %v650
    %v786 = vunpack.c.l.b16 %v651
    %v787 = vunpack.c.l.b16 %v652
    %v788 = vunpack.c.l.b16 %v653
    %v789 = vunpack.c.l.b16 %v654
    %v790 = vunpack.c.l.b16 %v655
    %v791 = vunpack.c.l.b16 %v656
    %v792 = vunpack.c.l.b16 %v657
    %v793 = vunpack.c.l.b16 %v658
    %v794 = vunpack.c.l.b16 %v659
    %v795 = vpack.c.b16 %v732, %v731
    %v796 = vpack.c.b16 %v734, %v733
    %v797 = vpack.c.b16 %v736, %v735
    %v798 = vpack.c.b16 %v738, %v737
    %v799 = vpack.c.b16 %v740, %v739
    %v800 = vpack.c.b16 %v742, %v741
    %v801 = vpack.c.b16 %v744, %v743
    %v802 = vpack.c.b16 %v746, %v745
    %v803 = vpack.c.b16 %v748, %v747
    %v804 = vpack.c.b16 %v750, %v749
    %v805 = vpack.c.b16 %v752, %v751
    %v806 = vpack.c.b16 %v754, %v753
    %v807 = vpack.c.b16 %v756, %v755
    %v808 = vpack.c.b16 %v758, %v757
    %v809 = vpack.c.b16 %v760, %v759
    %v810 = vpack.c.b16 %v762, %v761
    %v811 = vpack.c.b16 %v764, %v763
    %v812 = vpack.c.b16 %v766, %v765
    %v813 = vpack.c.b16 %v768, %v767
    %v814 = vpack.c.b16 %v770, %v769
    %v815 = vpack.c.b16 %v772, %v771
    %v816 = vpack.c.b16 %v774, %v773
    %v817 = vpack.c.b16 %v776, %v775
    %v818 = vpack.c.b16 %v778, %v777
    %v819 = vpack.c.b16 %v780, %v779
    %v820 = vpack.c.b16 %v782, %v781
    %v821 = vpack.c.b16 %v784, %v783
    %v822 = vpack.c.b16 %v786, %v785
    %v823 = vpack.c.b16 %v788, %v787
    %v824 = vpack.c.b16 %v790, %v789
    %v825 = vpack.c.b16 %v792, %v791
    %v826 = vpack.c.b16 %v794, %v793
    %859 = vmatprep.subr.bf16.mxu0 0
    %860 = vmatpush1.bf16.msra.mxu0 %v802
    %861 = vmatprep.subr.bf16.mxu0 0
    %862 = vmatpush1.bf16.msra.mxu0 %v801
    %863 = vmatprep.subr.bf16.mxu0 0
    %864 = vmatpush1.bf16.msra.mxu0 %v800
    %865 = vmatprep.subr.bf16.mxu0 0
    %866 = vmatpush1.bf16.msra.mxu0 %v799
    %867 = vmatprep.subr.bf16.mxu0 0
    %868 = vmatpush1.bf16.msra.mxu0 %v798
    %869 = vmatprep.subr.bf16.mxu0 0
    %870 = vmatpush1.bf16.msra.mxu0 %v797
    %871 = vmatprep.subr.bf16.mxu0 0
    %872 = vmatpush1.bf16.msra.mxu0 %v796
    %873 = vmatprep.subr.bf16.mxu0 0
    %874 = vmatpush1.bf16.msra.mxu0 %v795
    %875 = vmatprep.subr.bf16.mxu0 0
    %876 = vmatpush2.bf16.msra.mxu0 %v810
    %877 = vmatprep.subr.bf16.mxu0 0
    %878 = vmatpush2.bf16.msra.mxu0 %v809
    %879 = vmatprep.subr.bf16.mxu0 0
    %880 = vmatpush2.bf16.msra.mxu0 %v808
    %881 = vmatprep.subr.bf16.mxu0 0
    %882 = vmatpush2.bf16.msra.mxu0 %v807
    %883 = vmatprep.subr.bf16.mxu0 0
    %884 = vmatpush2.bf16.msra.mxu0 %v806
    %885 = vmatprep.subr.bf16.mxu0 0
    %886 = vmatpush2.bf16.msra.mxu0 %v805
    %887 = vmatprep.subr.bf16.mxu0 0
    %888 = vmatpush2.bf16.msra.mxu0 %v804
    %889 = vmatprep.subr.bf16.mxu0 0
    %890 = vmatpush2.bf16.msra.mxu0 %v803
    %891 = vmatprep.mubr.bf16.mxu0 %v593
    %892 = vmatmul.mubr.bf16.gmra.mxu0 %v592
    %v893 = vpop.f32.mrf.mxu0
    %v894 = vadd.f32 %v665, %v893
    %v895 = vpop.f32.mrf.mxu0
    %v896 = vpop.f32.mrf.mxu0
    %v897 = vpop.f32.mrf.mxu0
    %898 = vdwg.mxu0
    %899 = vmatprep.subr.bf16.mxu0 0
    %900 = vmatpush1.bf16.msra.mxu0 %v818
    %901 = vmatprep.subr.bf16.mxu0 0
    %902 = vmatpush1.bf16.msra.mxu0 %v817
    %903 = vmatprep.subr.bf16.mxu0 0
    %904 = vmatpush1.bf16.msra.mxu0 %v816
    %905 = vmatprep.subr.bf16.mxu0 0
    %906 = vmatpush1.bf16.msra.mxu0 %v815
    %907 = vmatprep.subr.bf16.mxu0 0
    %908 = vmatpush1.bf16.msra.mxu0 %v814
    %909 = vmatprep.subr.bf16.mxu0 0
    %910 = vmatpush1.bf16.msra.mxu0 %v813
    %911 = vmatprep.subr.bf16.mxu0 0
    %912 = vmatpush1.bf16.msra.mxu0 %v812
    %913 = vmatprep.subr.bf16.mxu0 0
    %914 = vmatpush1.bf16.msra.mxu0 %v811
    %915 = vmatprep.subr.bf16.mxu0 0
    %916 = vmatpush2.bf16.msra.mxu0 %v826
    %917 = vmatprep.subr.bf16.mxu0 0
    %918 = vmatpush2.bf16.msra.mxu0 %v825
    %919 = vmatprep.subr.bf16.mxu0 0
    %920 = vmatpush2.bf16.msra.mxu0 %v824
    %921 = vmatprep.subr.bf16.mxu0 0
    %922 = vmatpush2.bf16.msra.mxu0 %v823
    %923 = vmatprep.subr.bf16.mxu0 0
    %924 = vmatpush2.bf16.msra.mxu0 %v822
    %925 = vmatprep.subr.bf16.mxu0 0
    %926 = vmatpush2.bf16.msra.mxu0 %v821
    %927 = vmatprep.subr.bf16.mxu0 0
    %928 = vmatpush2.bf16.msra.mxu0 %v820
    %929 = vmatprep.subr.bf16.mxu0 0
    %930 = vmatpush2.bf16.msra.mxu0 %v819
    %931 = vmatprep.mubr.bf16.mxu0 %v595
    %932 = vmatmul.mubr.bf16.gmra.mxu0 %v594
    %v933 = vpop.f32.mrf.mxu0
    %v934 = vadd.f32 %v894, %v933
    %v935 = vpop.f32.mrf.mxu0
    %v936 = vpop.f32.mrf.mxu0
    %v937 = vpop.f32.mrf.mxu0
    %938 = vdwg.mxu0
    %v939 = vmax.f32 %v934, 0.0
    %v940 = vpack.c.bf16 %v939, %v939
    %v941 = vld [vmem:[#allocation10] sm:$0xf]
    %v942 = vld [vmem:[#allocation10 + $0x4] sm:$0xf]
    %v943 = vld [vmem:[#allocation10 + $0x8] sm:$0xf]
    %v944 = vld [vmem:[#allocation10 + $0xc] sm:$0xf]
    %v945 = vld [vmem:[#allocation10 + $0x10] sm:$0xf]
    %v946 = vld [vmem:[#allocation10 + $0x14] sm:$0xf]
    %v947 = vld [vmem:[#allocation10 + $0x18] sm:$0xf]
    %v948 = vld [vmem:[#allocation10 + $0x1c] sm:$0xf]
    %v949 = vld [vmem:[#allocation10 + $0x20] sm:$0xf]
    %v950 = vld [vmem:[#allocation10 + $0x24] sm:$0xf]
    %v951 = vld [vmem:[#allocation10 + $0x28] sm:$0xf]
    %v952 = vld [vmem:[#allocation10 + $0x2c] sm:$0xf]
    %v953 = vld [vmem:[#allocation10 + $0x30] sm:$0xf]
    %v954 = vld [vmem:[#allocation10 + $0x34] sm:$0xf]
    %v955 = vld [vmem:[#allocation10 + $0x38] sm:$0xf]
    %v956 = vld [vmem:[#allocation10 + $0x3c] sm:$0xf]
    %v957 = vld [vmem:[%s6] sm:$0x1]
    %v959 = vlaneseq
    %v960 = vshrl.u32 %v959, 7
    %v961 = vsub.s32 0, %v960
    %v962 = vrot.slane %v957, %v961
    %v980 = vunpack.c.l.b16 %v941
    %v981 = vunpack.c.l.b16 %v942
    %v982 = vunpack.c.l.b16 %v943
    %v983 = vunpack.c.l.b16 %v944
    %v984 = vunpack.c.l.b16 %v945
    %v985 = vunpack.c.l.b16 %v946
    %v986 = vunpack.c.l.b16 %v947
    %v987 = vunpack.c.l.b16 %v948
    %v988 = vunpack.c.l.b16 %v949
    %v989 = vunpack.c.l.b16 %v950
    %v990 = vunpack.c.l.b16 %v951
    %v991 = vunpack.c.l.b16 %v952
    %v992 = vunpack.c.l.b16 %v953
    %v993 = vunpack.c.l.b16 %v954
    %v994 = vunpack.c.l.b16 %v955
    %v995 = vunpack.c.l.b16 %v956
    %v996 = vpack.c.b16 %v981, %v980
    %v997 = vpack.c.b16 %v983, %v982
    %v998 = vpack.c.b16 %v985, %v984
    %v999 = vpack.c.b16 %v987, %v986
    %v1000 = vpack.c.b16 %v989, %v988
    %v1001 = vpack.c.b16 %v991, %v990
    %v1002 = vpack.c.b16 %v993, %v992
    %v1003 = vpack.c.b16 %v995, %v994
    %1012 = vmatprep.subr.bf16.mxu0 0
    %1013 = vmatpush1.bf16.msra.mxu0 %v1003
    %1014 = vmatprep.subr.bf16.mxu0 0
    %1015 = vmatpush1.bf16.msra.mxu0 %v1002
    %1016 = vmatprep.subr.bf16.mxu0 0
    %1017 = vmatpush1.bf16.msra.mxu0 %v1001
    %1018 = vmatprep.subr.bf16.mxu0 0
    %1019 = vmatpush1.bf16.msra.mxu0 %v1000
    %1020 = vmatprep.subr.bf16.mxu0 0
    %1021 = vmatpush1.bf16.msra.mxu0 %v999
    %1022 = vmatprep.subr.bf16.mxu0 0
    %1023 = vmatpush1.bf16.msra.mxu0 %v998
    %1024 = vmatprep.subr.bf16.mxu0 0
    %1025 = vmatpush1.bf16.msra.mxu0 %v997
    %1026 = vmatprep.subr.bf16.mxu0 0
    %1027 = vmatpush1.bf16.msra.mxu0 %v996
    %1028 = vmatprep.subr.bf16.mxu0 0
    %1029 = vmatpush2.bf16.msra.mxu0 0
    %1030 = vmatprep.subr.bf16.mxu0 0
    %1031 = vmatpush2.bf16.msra.mxu0 0
    %1032 = vmatprep.subr.bf16.mxu0 0
    %1033 = vmatpush2.bf16.msra.mxu0 0
    %1034 = vmatprep.subr.bf16.mxu0 0
    %1035 = vmatpush2.bf16.msra.mxu0 0
    %1036 = vmatprep.subr.bf16.mxu0 0
    %1037 = vmatpush2.bf16.msra.mxu0 0
    %1038 = vmatprep.subr.bf16.mxu0 0
    %1039 = vmatpush2.bf16.msra.mxu0 0
    %1040 = vmatprep.subr.bf16.mxu0 0
    %1041 = vmatpush2.bf16.msra.mxu0 0
    %1042 = vmatprep.subr.bf16.mxu0 0
    %1043 = vmatpush2.bf16.msra.mxu0 0
    %1044 = vmatprep.mubr.bf16.mxu0 0
    %1045 = vmatmul.mubr.bf16.gmra.mxu0 %v940
    %v1046 = vpop.f32.mrf.mxu0
    %v1047 = vadd.f32 %v962, %v1046
    %v1048 = vpop.f32.mrf.mxu0
    %v1049 = vpop.f32.mrf.mxu0
    %v1050 = vpop.f32.mrf.mxu0
    %1051 = vdwg.mxu0
    %1052 = vst [vmem:[#allocation11] sm:$0xff] %v1047
    // Predicated region
    $region50: #{tpu_custom_call.1} parent=1 // pred_check
      _
    $region51: #{tpu_custom_call.1} parent=1 // pred_check_branch
      %1054 = sbr.rel (0) target = $region53
    $region52: #{tpu_custom_call.1} parent=1 // pred_region
      %s1056 = ssub.s32 128, 128
      %1057 = vsyncadd [#allocation4], %s1056
      %s1059 = sshll.u32 [#allocation11], 4
      %s1060 = int_to_ptr.vmem [resolvable:$true] %s1059
      %1062 = dma.vmem_to_hbm [thread:$0]  %s1060, 128, %s7, [#allocation4]
    $region53: #{tpu_custom_call.1} parent=1 // pred_fallthru
      _
    // Predicated region
    $region54: #{tpu_custom_call.1} parent=1 // pred_check
      _
    $region55: #{tpu_custom_call.1} parent=1 // pred_check_branch
      %1064 = sbr.rel (0) target = $region57
    $region56: #{tpu_custom_call.1} parent=1 // pred_region
      %1065 = dma.done [#allocation4], 128
    $region57: #{tpu_custom_call.1} parent=1 // pred_fallthru
      _
    %1066 = vsyncpa [#allocation3], 1
    %1067 = vsyncpa [#allocation6], 1
    %1068 = vsyncpa [#allocation9], 1
    %1069 = vsyncpa [#allocation4], 1

</llo_original>
